<compile_context>
chip_gen: v7x
topology: tpu7x:2x2x1
jax: 0.10.0
libtpu: 0.0.40
codegen_flags: <defaults>
</compile_context>

<pallas_src>
import functools

import jax
import jax.numpy as jnp
from jax.experimental import pallas as pl
from jax.experimental.pallas import tpu as pltpu


def _normalize_heads(v, num_head, head_dim, eps):
    """Per-head L2 normalization over the feature axis; v is (rows, num_head * head_dim)."""
    parts = []
    # num_head is small & static -> unrolled python loop with static slices.
    # head_dim is a multiple of 128 in the intended configs, so the slices are
    # lane-tile aligned (no relayout copies); if not, they stay correct but cost more.
    for h in range(num_head):
        vh = v[:, h * head_dim:(h + 1) * head_dim]                # (rows, head_dim)
        ssq = jnp.sum(vh * vh, axis=-1, keepdims=True)            # (rows, 1)
        inv = pl.reciprocal(jnp.sqrt(ssq) + eps, approx=False)    # tiny vector -> cheap
        parts.append(vh * inv)
    return jnp.concatenate(parts, axis=1)                         # (rows, F)


def multihead_kernel(x_ref, w_ref, y_ref, nw_ref, *,
                     num_head, head_dim, scale, gamma, mxu_dtype):
    # Normalize the weight tile only when it changes (batch step 0 of each class tile);
    # cache the normalized tile in persistent VMEM scratch for the remaining batch tiles.
    @pl.when(pl.program_id(1) == 0)
    def _():
        w = w_ref[...].astype(jnp.float32)                                   # (tc, F)
        nw_ref[...] = _normalize_heads(w, num_head, head_dim, gamma).astype(mxu_dtype)

    x = x_ref[...].astype(jnp.float32)                                       # (bm, F)
    nx = _normalize_heads(x, num_head, head_dim, 1e-8).astype(mxu_dtype)     # (bm, F)

    # Single MXU matmul over K = F, contracting dim 1 of both operands (no .T / XLU).
    acc = jax.lax.dot_general(
        nx, nw_ref[...],
        dimension_numbers=(((1,), (1,)), ((), ())),
        preferred_element_type=jnp.float32)                                  # (bm, tc)
    y_ref[...] = (scale * acc).astype(y_ref.dtype)


def _pick_tile(dim, preferred=(512, 256, 128)):
    if dim <= preferred[0]:
        return dim
    for t in preferred:
        if dim % t == 0:
            return t
    return dim


def multihead_forward(x, weight, *, num_head=2, tau=16.0, gamma=0.03125,
                      bm=None, tc=None):
    """x: (B, feat_dim), weight: (num_classes, feat_dim) -> (B, num_classes)."""
    B, F = x.shape
    C, Fw = weight.shape
    assert F == Fw and F % num_head == 0
    head_dim = F // num_head
    scale = tau / num_head

    if bm is None:
        bm = _pick_tile(B)
    if tc is None:
        tc = _pick_tile(C)
    assert B % bm == 0 and C % tc == 0

    # bf16 operands feed the MXU at full rate; normalization math always stays f32
    # (v5e VPU/EUP have no bf16 path).
    mxu_dtype = jnp.bfloat16 if x.dtype == jnp.bfloat16 else jnp.float32
    in_bytes = jnp.dtype(x.dtype).itemsize
    w_bytes = jnp.dtype(weight.dtype).itemsize
    mxu_bytes = jnp.dtype(mxu_dtype).itemsize

    # Double-buffered x / w / y blocks + persistent normalized-weight scratch, with
    # headroom; clamp under ~48 MiB so it also fits v7x's 64 MiB per-core VMEM.
    est = (2 * (bm * F * in_bytes + tc * F * w_bytes + bm * tc * in_bytes)
           + tc * F * mxu_bytes)
    vmem_limit = int(min(48 << 20, max(32 << 20, 2 * est)))

    kernel = functools.partial(
        multihead_kernel,
        num_head=num_head, head_dim=head_dim,
        scale=scale, gamma=gamma, mxu_dtype=mxu_dtype)

    return pl.pallas_call(
        kernel,
        out_shape=jax.ShapeDtypeStruct((B, C), x.dtype),
        grid_spec=pltpu.PrefetchScalarGridSpec(
            num_scalar_prefetch=0,
            grid=(C // tc, B // bm),                          # class tiles outer, batch inner
            in_specs=[
                pl.BlockSpec((bm, F), lambda c, b: (b, 0)),   # x batch tile
                pl.BlockSpec((tc, F), lambda c, b: (c, 0)),   # weight class tile
            ],
            out_specs=pl.BlockSpec((bm, tc), lambda c, b: (b, c)),
            scratch_shapes=[pltpu.VMEM((tc, F), mxu_dtype)],  # cached normalized weight
        ),
        compiler_params=pltpu.CompilerParams(
            # Class axis may be split across TensorCores; batch axis must stay in-order so
            # the pl.when(batch_step == 0) weight-normalization cache is filled before use.
            dimension_semantics=("parallel", "arbitrary"),
            vmem_limit_bytes=vmem_limit,
        ),
    )(x, weight)


def multihead_reference(x, weight, *, num_head=2, tau=16.0, gamma=0.03125):
    """Pure-JAX reference mirroring the PyTorch forward."""
    B, F = x.shape
    head_dim = F // num_head
    scale = tau / num_head
    xs, ws = [], []
    for h in range(num_head):
        xh = x[:, h * head_dim:(h + 1) * head_dim]
        wh = weight[:, h * head_dim:(h + 1) * head_dim]
        xs.append(xh / (jnp.linalg.norm(xh, axis=1, keepdims=True) + 1e-8))
        ws.append(wh / (jnp.linalg.norm(wh, axis=1, keepdims=True) + gamma))
    nx = jnp.concatenate(xs, axis=1)
    nw = jnp.concatenate(ws, axis=1)
    return (nx * scale) @ nw.T


if __name__ == "__main__":
    NUM_HEAD = 2
    TAU = 16.0
    GAMMA = 0.03125

    key = jax.random.PRNGKey(0)

    # Case 1: small shapes consistent with the module (feat_dim divisible by num_head).
    B, FEAT_DIM, NUM_CLASSES = 8, 256, 16
    kx, kw, key = jax.random.split(key, 3)
    x = jax.random.normal(kx, (B, FEAT_DIM), dtype=jnp.float32)
    # reset_parameters: normal_(weight, 0, 0.01)
    weight = 0.01 * jax.random.normal(kw, (NUM_CLASSES, FEAT_DIM), dtype=jnp.float32)

    y = multihead_forward(x, weight, num_head=NUM_HEAD, tau=TAU, gamma=GAMMA)
    y = jax.block_until_ready(y)
    y_ref = multihead_reference(x, weight, num_head=NUM_HEAD, tau=TAU, gamma=GAMMA)
    assert y.shape == (B, NUM_CLASSES)
    assert jnp.allclose(y, y_ref, atol=1e-4, rtol=1e-4)

    # Case 2: exercise the multi-tile grid path (class tiles + cached weight normalization
    # reused across batch tiles).
    B2, F2, C2 = 16, 256, 256
    kx2, kw2 = jax.random.split(key)
    x2 = jax.random.normal(kx2, (B2, F2), dtype=jnp.float32)
    w2 = 0.01 * jax.random.normal(kw2, (C2, F2), dtype=jnp.float32)
    y2 = multihead_forward(x2, w2, num_head=NUM_HEAD, tau=TAU, gamma=GAMMA, bm=8, tc=128)
    y2 = jax.block_until_ready(y2)
    y2_ref = multihead_reference(x2, w2, num_head=NUM_HEAD, tau=TAU, gamma=GAMMA)
    assert y2.shape == (B2, C2)
    assert jnp.allclose(y2, y2_ref, atol=1e-4, rtol=1e-4)

    print("KERNEL_OK")
</pallas_src>

<mosaic_0001>
module attributes {stable_mosaic.version = 11 : i64} {
  func.func @multihead_kernel(%arg0: i32, %arg1: i32, %arg2: memref<8x256xf32, #tpu.memory_space<vmem>>, %arg3: memref<16x256xf32, #tpu.memory_space<vmem>>, %arg4: memref<8x16xf32, #tpu.memory_space<vmem>>, %arg5: memref<16x256xf32, #tpu.memory_space<vmem>>) attributes {dimension_semantics = [#tpu.dimension_semantics<parallel>, #tpu.dimension_semantics<arbitrary>], iteration_bounds = array<i64: 1, 1>, scalar_prefetch = 0 : i64, scratch_operands = 1 : i64, tpu.core_type = #tpu.core_type<tc>, window_params = [{transform_indices = @transform_0, window_bounds = array<i64: 8, 256>}, {transform_indices = @transform_1, window_bounds = array<i64: 16, 256>}, {transform_indices = @transform_2, window_bounds = array<i64: 8, 16>}]} {
    %c0_i32 = arith.constant 0 : i32
    %0 = arith.cmpi eq, %arg1, %c0_i32 : i32
    %1 = arith.extui %0 : i1 to i32
    %c0_i32_0 = arith.constant 0 : i32
    %2 = arith.cmpi ne, %1, %c0_i32_0 : i32
    scf.if %2 {
      %c0_11 = arith.constant 0 : index
      %c0_12 = arith.constant 0 : index
      %30 = vector.load %arg3[%c0_11, %c0_12] : memref<16x256xf32, #tpu.memory_space<vmem>>, vector<16x256xf32>
      %31 = vector.extract_strided_slice %30 {offsets = [0, 0], sizes = [16, 128], strides = [1, 1]} : vector<16x256xf32> to vector<16x128xf32>
      %32 = arith.mulf %31, %31 : vector<16x128xf32>
      %cst_13 = arith.constant dense<0.000000e+00> : vector<16xf32>
      %33 = vector.multi_reduction <add>, %32, %cst_13 [1] : vector<16x128xf32> to vector<16xf32>
      %34 = vector.shape_cast %33 : vector<16xf32> to vector<16x1xf32>
      %35 = math.sqrt %34 : vector<16x1xf32>
      %cst_14 = arith.constant 3.125000e-02 : f32
      %36 = vector.broadcast %cst_14 : f32 to vector<16x1xf32>
      %37 = arith.addf %35, %36 : vector<16x1xf32>
      %38 = tpu.reciprocal %37 : vector<16x1xf32> -> vector<16x1xf32>
      %39 = vector.broadcast %38 : vector<16x1xf32> to vector<16x128xf32>
      %40 = arith.mulf %31, %39 : vector<16x128xf32>
      %41 = vector.extract_strided_slice %30 {offsets = [0, 128], sizes = [16, 128], strides = [1, 1]} : vector<16x256xf32> to vector<16x128xf32>
      %42 = arith.mulf %41, %41 : vector<16x128xf32>
      %cst_15 = arith.constant dense<0.000000e+00> : vector<16xf32>
      %43 = vector.multi_reduction <add>, %42, %cst_15 [1] : vector<16x128xf32> to vector<16xf32>
      %44 = vector.shape_cast %43 : vector<16xf32> to vector<16x1xf32>
      %45 = math.sqrt %44 : vector<16x1xf32>
      %cst_16 = arith.constant 3.125000e-02 : f32
      %46 = vector.broadcast %cst_16 : f32 to vector<16x1xf32>
      %47 = arith.addf %45, %46 : vector<16x1xf32>
      %48 = tpu.reciprocal %47 : vector<16x1xf32> -> vector<16x1xf32>
      %49 = vector.broadcast %48 : vector<16x1xf32> to vector<16x128xf32>
      %50 = arith.mulf %41, %49 : vector<16x128xf32>
      %51 = tpu.concatenate %40, %50 in 1 : vector<16x128xf32>, vector<16x128xf32> -> vector<16x256xf32>
      %c0_17 = arith.constant 0 : index
      %c0_18 = arith.constant 0 : index
      %52 = vector.load %arg5[%c0_17, %c0_18] : memref<16x256xf32, #tpu.memory_space<vmem>>, vector<16x256xf32>
      tpu.vector_store %arg5[%c0_17, %c0_18], %51 {strides = array<i32>} : memref<16x256xf32, #tpu.memory_space<vmem>>, vector<16x256xf32>,
    } else {
    }
    %c0 = arith.constant 0 : index
    %c0_1 = arith.constant 0 : index
    %3 = vector.load %arg2[%c0, %c0_1] : memref<8x256xf32, #tpu.memory_space<vmem>>, vector<8x256xf32>
    %4 = vector.extract_strided_slice %3 {offsets = [0, 0], sizes = [8, 128], strides = [1, 1]} : vector<8x256xf32> to vector<8x128xf32>
    %5 = arith.mulf %4, %4 : vector<8x128xf32>
    %cst = arith.constant dense<0.000000e+00> : vector<8xf32>
    %6 = vector.multi_reduction <add>, %5, %cst [1] : vector<8x128xf32> to vector<8xf32>
    %7 = vector.shape_cast %6 : vector<8xf32> to vector<8x1xf32>
    %8 = math.sqrt %7 : vector<8x1xf32>
    %cst_2 = arith.constant 9.99999993E-9 : f32
    %9 = vector.broadcast %cst_2 : f32 to vector<8x1xf32>
    %10 = arith.addf %8, %9 : vector<8x1xf32>
    %11 = tpu.reciprocal %10 : vector<8x1xf32> -> vector<8x1xf32>
    %12 = vector.broadcast %11 : vector<8x1xf32> to vector<8x128xf32>
    %13 = arith.mulf %4, %12 : vector<8x128xf32>
    %14 = vector.extract_strided_slice %3 {offsets = [0, 128], sizes = [8, 128], strides = [1, 1]} : vector<8x256xf32> to vector<8x128xf32>
    %15 = arith.mulf %14, %14 : vector<8x128xf32>
    %cst_3 = arith.constant dense<0.000000e+00> : vector<8xf32>
    %16 = vector.multi_reduction <add>, %15, %cst_3 [1] : vector<8x128xf32> to vector<8xf32>
    %17 = vector.shape_cast %16 : vector<8xf32> to vector<8x1xf32>
    %18 = math.sqrt %17 : vector<8x1xf32>
    %cst_4 = arith.constant 9.99999993E-9 : f32
    %19 = vector.broadcast %cst_4 : f32 to vector<8x1xf32>
    %20 = arith.addf %18, %19 : vector<8x1xf32>
    %21 = tpu.reciprocal %20 : vector<8x1xf32> -> vector<8x1xf32>
    %22 = vector.broadcast %21 : vector<8x1xf32> to vector<8x128xf32>
    %23 = arith.mulf %14, %22 : vector<8x128xf32>
    %24 = tpu.concatenate %13, %23 in 1 : vector<8x128xf32>, vector<8x128xf32> -> vector<8x256xf32>
    %c0_5 = arith.constant 0 : index
    %c0_6 = arith.constant 0 : index
    %25 = vector.load %arg5[%c0_5, %c0_6] : memref<16x256xf32, #tpu.memory_space<vmem>>, vector<16x256xf32>
    %cst_7 = arith.constant dense<0.000000e+00> : vector<8x16xf32>
    %26 = tpu.matmul %24, %25, %cst_7 {dimension_numbers = #tpu.dot_dimension_numbers<[1], [1], [0], [0], [0, 0, 1, 0], [], []>} : vector<8x256xf32>, vector<16x256xf32>, vector<8x16xf32> -> vector<8x16xf32>
    %cst_8 = arith.constant 8.000000e+00 : f32
    %27 = vector.broadcast %cst_8 : f32 to vector<8x16xf32>
    %28 = arith.mulf %27, %26 : vector<8x16xf32>
    %c0_9 = arith.constant 0 : index
    %c0_10 = arith.constant 0 : index
    %29 = vector.load %arg4[%c0_9, %c0_10] : memref<8x16xf32, #tpu.memory_space<vmem>>, vector<8x16xf32>
    tpu.vector_store %arg4[%c0_9, %c0_10], %28 {strides = array<i32>} : memref<8x16xf32, #tpu.memory_space<vmem>>, vector<8x16xf32>,
    return
  }
  func.func @transform_0(%arg0: i32, %arg1: i32) -> (i32, i32) {
    %c0_i32 = arith.constant 0 : i32
    %c0_i32_0 = arith.constant 0 : i32
    return %arg1, %c0_i32 : i32, i32
  }
  func.func @transform_1(%arg0: i32, %arg1: i32) -> (i32, i32) {
    %c0_i32 = arith.constant 0 : i32
    %c0_i32_0 = arith.constant 0 : i32
    return %arg0, %c0_i32 : i32, i32
  }
  func.func @transform_2(%arg0: i32, %arg1: i32) -> (i32, i32) {
    %c0_i32 = arith.constant 0 : i32
    return %arg1, %arg0 : i32, i32
  }
}

</mosaic_0001>

<llo_original>
// kernel: tpu_custom_call.1
$region0: #{tpu_custom_call.1}
  #allocation0 [shape = 'u32[]', space=smem, size = 0x4, offset = 0x4, fixed_abs, tag = 'smem constant byte address 0x4 - core index']
  #allocation1 [shape = 'u32[144,128]{1,0:T(1,128)}', space=vmem, size = 0x12000, scoped, tag = 'internal scratch']
  #allocation2 [shape = 'f32[16,256]{1,0:T(8,128)}', space=vmem, size = 0x4000, scoped, tag = 'scratch operand']
  %s0 = inlined_call_operand.hbm [shape: f32[8,256], index: 0, kind: input, shape index: {}]
  %s1 = inlined_call_operand.hbm [shape: f32[16,256], index: 1, kind: input, shape index: {}]
  %s2 = inlined_call_operand.hbm [shape: f32[8,16], index: 2, kind: output, shape index: {}]
  %s3 = sld [smem:[#allocation0]]
  $region30: #{tpu_custom_call.1} parent=0
    _
  %s5 = ssub.s32 1, %s3
  %s6 = scalar_select 0, %s5, %s3
  $region1: #{tpu_custom_call.1} parent=0
    #allocation3 [shape = 'u8[8192]{0}', space=vmem, size = 0x2000, scoped, tag = 'input window, operand 0, single buffered']
    #allocation4 [shape = 's32[1]{0}', space=sflag, size = 0x4, scoped, tag = 'scoped memory for tpu_custom_call.1']
    #allocation5 [shape = 's32[1]{0}', space=sflag, size = 0x4, scoped, tag = 'scoped memory for tpu_custom_call.1']
    #allocation6 [shape = 'u8[16384]{0}', space=vmem, size = 0x4000, scoped, tag = 'input window, operand 1, single buffered']
    #allocation7 [shape = 's32[1]{0}', space=sflag, size = 0x4, scoped, tag = 'scoped memory for tpu_custom_call.1']
    #allocation8 [shape = 'u8[4096]{0}', space=vmem, size = 0x1000, scoped, tag = 'output window, operand 0, single buffered']
    %7 = vsyncpa [#allocation4], 0
    %8 = vsyncpa [#allocation7], 0
    %9 = vsyncpa [#allocation5], 0
    // Predicated region
    $region2: #{tpu_custom_call.1} parent=1 // pred_check
      _
    $region3: #{tpu_custom_call.1} parent=1 // pred_check_branch
      %11 = sbr.rel (0) target = $region5
    $region4: #{tpu_custom_call.1} parent=1 // pred_region
      %s13 = ssub.s32 256, 256
      %14 = vsyncadd [#allocation4], %s13
      %s16 = sshll.u32 [#allocation3], 4
      %s17 = int_to_ptr.vmem [resolvable:$true] %s16
      %19 = dma.hbm_to_vmem [thread:$0]  %s0, 256, %s17, [#allocation4]
    $region5: #{tpu_custom_call.1} parent=1 // pred_fallthru
      _
    // Predicated region
    $region6: #{tpu_custom_call.1} parent=1 // pred_check
      _
    $region7: #{tpu_custom_call.1} parent=1 // pred_check_branch
      %21 = sbr.rel (0) target = $region9
    $region8: #{tpu_custom_call.1} parent=1 // pred_region
      %s23 = ssub.s32 512, 512
      %24 = vsyncadd [#allocation7], %s23
      %s25 = sshll.u32 [#allocation6], 4
      %s26 = int_to_ptr.vmem [resolvable:$true] %s25
      %31 = dma.hbm_to_vmem [thread:$0]  %s1, 512, %s26, [#allocation7], 256, 256, 16
    $region9: #{tpu_custom_call.1} parent=1 // pred_fallthru
      _
    // Predicated region
    $region10: #{tpu_custom_call.1} parent=1 // pred_check
      _
    $region11: #{tpu_custom_call.1} parent=1 // pred_check_branch
      %33 = sbr.rel (0) target = $region13
    $region12: #{tpu_custom_call.1} parent=1 // pred_region
      %34 = dma.done [#allocation4], 256
    $region13: #{tpu_custom_call.1} parent=1 // pred_fallthru
      _
    // Predicated region
    $region14: #{tpu_custom_call.1} parent=1 // pred_check
      _
    $region15: #{tpu_custom_call.1} parent=1 // pred_check_branch
      %36 = sbr.rel (0) target = $region17
    $region16: #{tpu_custom_call.1} parent=1 // pred_region
      %37 = dma.done [#allocation7], 512
    $region17: #{tpu_custom_call.1} parent=1 // pred_fallthru
      _
    %p38 = scmp.eq.s32.totalorder 0, 0
    // Predicated region
    $region18: #{tpu_custom_call.1} parent=1 // pred_check
      %p39 = pneg %p38
    $region19: #{tpu_custom_call.1} parent=1 // pred_check_branch
      %41 = sbr.rel (%p39) target = $region21
    $region20: #{tpu_custom_call.1} parent=1 // pred_region
      %v42 = vld [vmem:[#allocation6] sm:$0xff]
      %v43 = vld [vmem:[#allocation6 + $0x8] sm:$0xff]
      %v44 = vld [vmem:[#allocation6 + $0x10] sm:$0xff]
      %v45 = vld [vmem:[#allocation6 + $0x18] sm:$0xff]
      %v46 = vmul.f32 %v42, %v42
      %v47 = vmul.f32 %v44, %v44
      %48 = vadd.xlane.f32.xlu0 %v46
      %v49 = vpop.xlane.xlu0 %48
      %50 = vadd.xlane.f32.xlu0 %v47
      %v51 = vpop.xlane.xlu0 %50
      %v52 = vrsqrt.pop %v49
      %v53 = vmul.f32 %v49, %v52
      %vm54 = vcmp.eq.f32.partialorder %v49, inf
      %v55 = vsel %vm54, %v49, %v53
      %vm56 = vcmp.eq.f32.partialorder %v49, 0.0
      %v57 = vand.u32 %v49, 2147483648
      %v58 = vsel %vm56, %v57, %v55
      %v59 = vrsqrt.pop %v51
      %v60 = vmul.f32 %v51, %v59
      %vm61 = vcmp.eq.f32.partialorder %v51, inf
      %v62 = vsel %vm61, %v51, %v60
      %vm63 = vcmp.eq.f32.partialorder %v51, 0.0
      %v64 = vand.u32 %v51, 2147483648
      %v65 = vsel %vm63, %v64, %v62
      %v66 = vadd.f32 %v58, 0.03125
      %v67 = vadd.f32 %v65, 0.03125
      %v68 = vrcp.pop %v66
      %v69 = vrcp.pop %v67
      %v70 = vmul.f32 %v42, %v68
      %v71 = vmul.f32 %v44, %v69
      %v72 = vmul.f32 %v43, %v43
      %v73 = vmul.f32 %v45, %v45
      %74 = vadd.xlane.f32.xlu0 %v72
      %v75 = vpop.xlane.xlu0 %74
      %76 = vadd.xlane.f32.xlu0 %v73
      %v77 = vpop.xlane.xlu0 %76
      %v78 = vrsqrt.pop %v75
      %v79 = vmul.f32 %v75, %v78
      %vm80 = vcmp.eq.f32.partialorder %v75, inf
      %v81 = vsel %vm80, %v75, %v79
      %vm82 = vcmp.eq.f32.partialorder %v75, 0.0
      %v83 = vand.u32 %v75, 2147483648
      %v84 = vsel %vm82, %v83, %v81
      %v85 = vrsqrt.pop %v77
      %v86 = vmul.f32 %v77, %v85
      %vm87 = vcmp.eq.f32.partialorder %v77, inf
      %v88 = vsel %vm87, %v77, %v86
      %vm89 = vcmp.eq.f32.partialorder %v77, 0.0
      %v90 = vand.u32 %v77, 2147483648
      %v91 = vsel %vm89, %v90, %v88
      %v92 = vadd.f32 %v84, 0.03125
      %v93 = vadd.f32 %v91, 0.03125
      %v94 = vrcp.pop %v92
      %v95 = vrcp.pop %v93
      %v96 = vmul.f32 %v43, %v94
      %v97 = vmul.f32 %v45, %v95
      %98 = vst [vmem:[#allocation2] sm:$0xff] %v70
      %99 = vst [vmem:[#allocation2 + $0x8] sm:$0xff] %v96
      %100 = vst [vmem:[#allocation2 + $0x10] sm:$0xff] %v71
      %101 = vst [vmem:[#allocation2 + $0x18] sm:$0xff] %v97
    $region21: #{tpu_custom_call.1} parent=1 // pred_fallthru
      _
    %v102 = vld [vmem:[#allocation3] sm:$0xff]
    %v103 = vld [vmem:[#allocation3 + $0x8] sm:$0xff]
    %v104 = vmul.f32 %v102, %v102
    %105 = vadd.xlane.f32.xlu0 %v104
    %v106 = vpop.xlane.xlu0 %105
    %v107 = vrsqrt.pop %v106
    %v108 = vmul.f32 %v106, %v107
    %vm109 = vcmp.eq.f32.partialorder %v106, inf
    %v110 = vsel %vm109, %v106, %v108
    %vm111 = vcmp.eq.f32.partialorder %v106, 0.0
    %v112 = vand.u32 %v106, 2147483648
    %v113 = vsel %vm111, %v112, %v110
    %v114 = vadd.f32 %v113, 1e-08
    %v115 = vrcp.pop %v114
    %v116 = vmul.f32 %v102, %v115
    %v117 = vmul.f32 %v103, %v103
    %118 = vadd.xlane.f32.xlu0 %v117
    %v119 = vpop.xlane.xlu0 %118
    %v120 = vrsqrt.pop %v119
    %v121 = vmul.f32 %v119, %v120
    %vm122 = vcmp.eq.f32.partialorder %v119, inf
    %v123 = vsel %vm122, %v119, %v121
    %vm124 = vcmp.eq.f32.partialorder %v119, 0.0
    %v125 = vand.u32 %v119, 2147483648
    %v126 = vsel %vm124, %v125, %v123
    %v127 = vadd.f32 %v126, 1e-08
    %v128 = vrcp.pop %v127
    %v129 = vmul.f32 %v103, %v128
    %v130 = vld [vmem:[#allocation2] sm:$0xff]
    %v131 = vld [vmem:[#allocation2 + $0x8] sm:$0xff]
    %v132 = vld [vmem:[#allocation2 + $0x10] sm:$0xff]
    %v133 = vld [vmem:[#allocation2 + $0x18] sm:$0xff]
    %134 = vmatprep.subr.mxu0 %v131
    %135 = vmatpush1.xpose.msra.mxu0 %v130
    %136 = vmatprep.subr.mxu0 %v133
    %137 = vmatpush1.xpose.msra.mxu0 %v132
    %138 = vmatprep.subr.mxu0 0.0
    %139 = vmatpush1.xpose.msra.mxu0 0.0
    %140 = vmatprep.subr.mxu0 0.0
    %141 = vmatpush1.xpose.msra.mxu0 0.0
    %142 = vmatprep.subr.mxu0 0.0
    %143 = vmatpush1.xpose.msra.mxu0 0.0
    %144 = vmatprep.subr.mxu0 0.0
    %145 = vmatpush1.xpose.msra.mxu0 0.0
    %146 = vmatprep.subr.mxu0 0.0
    %147 = vmatpush1.xpose.msra.mxu0 0.0
    %148 = vmatprep.subr.mxu0 0.0
    %149 = vmatpush1.xpose.msra.mxu0 0.0
    %150 = vmatprep.subr.mxu0 0.0
    %151 = vmatpush1.xpose.msra.mxu0 0.0
    %152 = vmatprep.subr.mxu0 0.0
    %153 = vmatpush1.xpose.msra.mxu0 0.0
    %154 = vmatprep.subr.mxu0 0.0
    %155 = vmatpush1.xpose.msra.mxu0 0.0
    %156 = vmatprep.subr.mxu0 0.0
    %157 = vmatpush1.xpose.msra.mxu0 0.0
    %158 = vmatprep.subr.mxu0 0.0
    %159 = vmatpush1.xpose.msra.mxu0 0.0
    %160 = vmatprep.subr.mxu0 0.0
    %161 = vmatpush1.xpose.msra.mxu0 0.0
    %162 = vmatprep.subr.mxu0 0.0
    %163 = vmatpush1.xpose.msra.mxu0 0.0
    %164 = vmatprep.subr.mxu0 0.0
    %165 = vmatpush1.xpose.msra.mxu0 0.0
    %166 = vmatprep.subr.mxu0 0.0
    %167 = vmatpush1.xpose.msra.mxu0 0.0
    %168 = vmatprep.subr.mxu0 0.0
    %169 = vmatpush1.xpose.msra.mxu0 0.0
    %170 = vmatprep.subr.mxu0 0.0
    %171 = vmatpush1.xpose.msra.mxu0 0.0
    %172 = vmatprep.subr.mxu0 0.0
    %173 = vmatpush1.xpose.msra.mxu0 0.0
    %174 = vmatprep.subr.mxu0 0.0
    %175 = vmatpush1.xpose.msra.mxu0 0.0
    %176 = vmatprep.subr.mxu0 0.0
    %177 = vmatpush1.xpose.msra.mxu0 0.0
    %178 = vmatprep.subr.mxu0 0.0
    %179 = vmatpush1.xpose.msra.mxu0 0.0
    %180 = vmatprep.subr.mxu0 0.0
    %181 = vmatpush1.xpose.msra.mxu0 0.0
    %182 = vmatprep.subr.mxu0 0.0
    %183 = vmatpush1.xpose.msra.mxu0 0.0
    %184 = vmatprep.subr.mxu0 0.0
    %185 = vmatpush1.xpose.msra.mxu0 0.0
    %186 = vmatprep.subr.mxu0 0.0
    %187 = vmatpush1.xpose.msra.mxu0 0.0
    %188 = vmatprep.subr.mxu0 0.0
    %189 = vmatpush1.xpose.msra.mxu0 0.0
    %190 = vmatprep.subr.mxu0 0.0
    %191 = vmatpush1.xpose.msra.mxu0 0.0
    %192 = vmatprep.subr.mxu0 0.0
    %193 = vmatpush1.xpose.msra.mxu0 0.0
    %194 = vmatprep.subr.mxu0 0.0
    %195 = vmatpush1.xpose.msra.mxu0 0.0
    %196 = vmatprep.subr.mxu0 0.0
    %197 = vmatpush1.xpose.msra.mxu0 0.0
    %198 = vmatprep.mubr.f32.mxu0 %v129
    %199 = vmatmul.mubr.f32.gmra.mrb[0].mxu0 %v116
    %v200 = vpop.f32.mrb[0].mxu0
    %v201 = vadd.f32 0.0, %v200
    %v202 = vpop.f32.mrb[0].mxu0
    %203 = vdwg.mxu0
    %v204 = vmul.f32 %v201, 8.0
    %vm205 = vcmask 130048
    %206 = vst.msk [vmem:[#allocation8] sm:$0xff] %vm205, %v204
    // Predicated region
    $region22: #{tpu_custom_call.1} parent=1 // pred_check
      _
    $region23: #{tpu_custom_call.1} parent=1 // pred_check_branch
      %208 = sbr.rel (0) target = $region25
    $region24: #{tpu_custom_call.1} parent=1 // pred_region
      %s210 = ssub.s32 128, 128
      %211 = vsyncadd [#allocation5], %s210
      %s213 = sshll.u32 [#allocation8], 4
      %s214 = int_to_ptr.vmem [resolvable:$true] %s213
      %216 = dma.vmem_to_hbm [thread:$0]  %s214, 128, %s2, [#allocation5]
    $region25: #{tpu_custom_call.1} parent=1 // pred_fallthru
      _
    // Predicated region
    $region26: #{tpu_custom_call.1} parent=1 // pred_check
      _
    $region27: #{tpu_custom_call.1} parent=1 // pred_check_branch
      %218 = sbr.rel (0) target = $region29
    $region28: #{tpu_custom_call.1} parent=1 // pred_region
      %219 = dma.done [#allocation5], 128
    $region29: #{tpu_custom_call.1} parent=1 // pred_fallthru
      _
    %220 = vsyncpa [#allocation4], 1
    %221 = vsyncpa [#allocation7], 1
    %222 = vsyncpa [#allocation5], 1

</llo_original>
